<compile_context>
chip_gen: v5e
topology: v5e:2x2
jax: 0.10.0
libtpu: 0.0.40
codegen_flags: <defaults>
</compile_context>

<pallas_src>
import functools

import jax
import jax.numpy as jnp
from jax.experimental import pallas as pl
from jax.experimental.pallas import tpu as pltpu


def _round_up(n: int, m: int) -> int:
    return ((n + m - 1) // m) * m


def _net_sparse_kernel(x_ref, w1_ref, w2_ref, out_ref):
    """Fused forward: relu(x @ W1eff) @ W2eff  (W*eff = (w*mask*alpha).T, bf16)."""
    x = x_ref[...].astype(jnp.bfloat16)                                # (tb, 784)

    # fc1 + ReLU  (bf16 MXU inputs, f32 accumulation)
    h = jnp.dot(x, w1_ref[...], preferred_element_type=jnp.float32)   # (tb, 256)
    h = jnp.maximum(h, 0.0).astype(jnp.bfloat16)

    # fc2
    y = jnp.dot(h, w2_ref[...], preferred_element_type=jnp.float32)   # (tb, 10)
    out_ref[...] = y.astype(out_ref.dtype)


@functools.partial(jax.jit, static_argnames=("block_b",))
def net_sparse_forward(x, w1, mask1, alpha1, w2, mask2, alpha2, *, block_b=512):
    """x: (B, 784) f32; w1/mask1: (256, 784); w2/mask2: (10, 256); alpha*: scalar."""
    B, in_features = x.shape
    hid = w1.shape[0]
    out_features = w2.shape[0]

    a1 = jnp.asarray(alpha1, jnp.float32)
    a2 = jnp.asarray(alpha2, jnp.float32)

    # Fuse mask + alpha into the (static) weights outside the kernel, pre-
    # transpose to (K, N), cast to bf16.
    w1_eff = (w1 * mask1 * a1).T.astype(jnp.bfloat16)        # (784, 256)
    w2_eff = (w2 * mask2 * a2).T.astype(jnp.bfloat16)        # (256, 10)

    # Batch tiling: tile must be a multiple of 8 (sublanes); pad B if needed.
    # VMEM per step at tile_b=512: 2 x (512x784 f32) x-tiles = 3.2 MiB,
    # weights ~0.45 MiB, outputs negligible -> fits default scoped VMEM on
    # every generation.
    tile_b = min(block_b, _round_up(B, 8))
    tile_b = _round_up(tile_b, 8)
    b_padded = _round_up(B, tile_b)
    if b_padded != B:
        x = jnp.pad(x, ((0, b_padded - B), (0, 0)))

    grid = (b_padded // tile_b,)

    out = pl.pallas_call(
        _net_sparse_kernel,
        out_shape=jax.ShapeDtypeStruct((b_padded, out_features), jnp.float32),
        grid=grid,
        in_specs=[
            # x tile marches over the batch; pipelined/double-buffered.
            pl.BlockSpec((tile_b, in_features), lambda i: (i, 0)),
            # weights: constant block index -> stay VMEM-resident across steps.
            pl.BlockSpec((in_features, hid), lambda i: (0, 0)),
            pl.BlockSpec((hid, out_features), lambda i: (0, 0)),
        ],
        out_specs=pl.BlockSpec((tile_b, out_features), lambda i: (i, 0)),
        compiler_params=pltpu.CompilerParams(
            dimension_semantics=("parallel",),
        ),
    )(x, w1_eff, w2_eff)

    return out[:B]


if __name__ == "__main__":
    key = jax.random.PRNGKey(0)
    k_x, k_w1, k_m1, k_w2, k_m2 = jax.random.split(key, 5)

    B = 32                    # small batch; exercises a multi-step grid below
    IN, HID, OUT = 784, 256, 10

    x = jax.random.normal(k_x, (B, IN), dtype=jnp.float32)

    # Same parameter shapes as the nn.Module:
    #   fc1.weight/mask: (256, 784), fc1.alpha scalar
    #   fc2.weight/mask: (10, 256),  fc2.alpha scalar
    w1 = jax.random.normal(k_w1, (HID, IN), dtype=jnp.float32) * 0.05
    mask1 = jax.random.bernoulli(k_m1, 0.5, (HID, IN)).astype(jnp.float32)
    alpha1 = jnp.float32(1.0)

    w2 = jax.random.normal(k_w2, (OUT, HID), dtype=jnp.float32) * 0.05
    mask2 = jax.random.bernoulli(k_m2, 0.5, (OUT, HID)).astype(jnp.float32)
    alpha2 = jnp.float32(1.0)

    # Run with a small batch tile so the grid has multiple steps (B=32, tile=16).
    y = net_sparse_forward(x, w1, mask1, alpha1, w2, mask2, alpha2, block_b=16)
    y = jax.block_until_ready(y)
    assert y.shape == (B, OUT)

    # Precision-matched reference (bf16 weights/activations, f32 accumulation),
    # same semantics as F.linear(x, w*mask*alpha) -> relu -> F.linear.
    w1e = (w1 * mask1 * alpha1).astype(jnp.bfloat16)
    w2e = (w2 * mask2 * alpha2).astype(jnp.bfloat16)
    h_ref = jnp.maximum(
        jnp.dot(x.astype(jnp.bfloat16), w1e.T, preferred_element_type=jnp.float32), 0.0)
    y_ref = jnp.dot(h_ref.astype(jnp.bfloat16), w2e.T,
                    preferred_element_type=jnp.float32)
    assert jnp.allclose(y, y_ref, atol=2e-2, rtol=2e-2)

    # Loose sanity check against the pure-f32 module semantics.
    h32 = jnp.maximum(x @ (w1 * mask1 * alpha1).T, 0.0)
    y32 = h32 @ (w2 * mask2 * alpha2).T
    assert jnp.allclose(y, y32, atol=5e-2, rtol=5e-2)

    print("KERNEL_OK")
</pallas_src>

<mosaic_0001>
module attributes {stable_mosaic.version = 11 : i64} {
  func.func @_net_sparse_kernel(%arg0: i32, %arg1: memref<16x784xf32, #tpu.memory_space<vmem>>, %arg2: memref<784x256xbf16, #tpu.memory_space<vmem>>, %arg3: memref<256x10xbf16, #tpu.memory_space<vmem>>, %arg4: memref<16x10xf32, #tpu.memory_space<vmem>>) attributes {dimension_semantics = [#tpu.dimension_semantics<parallel>], iteration_bounds = array<i64: 2>, scalar_prefetch = 0 : i64, scratch_operands = 0 : i64, tpu.core_type = #tpu.core_type<tc>, window_params = [{transform_indices = @transform_0, window_bounds = array<i64: 16, 784>}, {pipeline_mode = #tpu.pipeline_mode<synchronous>, transform_indices = @transform_1, window_bounds = array<i64: 784, 256>}, {pipeline_mode = #tpu.pipeline_mode<synchronous>, transform_indices = @transform_2, window_bounds = array<i64: 256, 10>}, {transform_indices = @transform_3, window_bounds = array<i64: 16, 10>}]} {
    %c0 = arith.constant 0 : index
    %c0_0 = arith.constant 0 : index
    %0 = vector.load %arg1[%c0, %c0_0] : memref<16x784xf32, #tpu.memory_space<vmem>>, vector<16x784xf32>
    %1 = arith.truncf %0 : vector<16x784xf32> to vector<16x784xbf16>
    %c0_1 = arith.constant 0 : index
    %c0_2 = arith.constant 0 : index
    %2 = vector.load %arg2[%c0_1, %c0_2] : memref<784x256xbf16, #tpu.memory_space<vmem>>, vector<784x256xbf16>
    %cst = arith.constant dense<0.000000e+00> : vector<16x256xf32>
    %3 = tpu.matmul %1, %2, %cst {dimension_numbers = #tpu.dot_dimension_numbers<[1], [0], [0], [1], [0, 0, 1, 1], [], []>} : vector<16x784xbf16>, vector<784x256xbf16>, vector<16x256xf32> -> vector<16x256xf32>
    %cst_3 = arith.constant 0.000000e+00 : f32
    %4 = vector.broadcast %cst_3 : f32 to vector<16x256xf32>
    %5 = arith.maximumf %3, %4 : vector<16x256xf32>
    %6 = arith.truncf %5 : vector<16x256xf32> to vector<16x256xbf16>
    %c0_4 = arith.constant 0 : index
    %c0_5 = arith.constant 0 : index
    %7 = vector.load %arg3[%c0_4, %c0_5] : memref<256x10xbf16, #tpu.memory_space<vmem>>, vector<256x10xbf16>
    %cst_6 = arith.constant dense<0.000000e+00> : vector<16x10xf32>
    %8 = tpu.matmul %6, %7, %cst_6 {dimension_numbers = #tpu.dot_dimension_numbers<[1], [0], [0], [1], [0, 0, 1, 1], [], []>} : vector<16x256xbf16>, vector<256x10xbf16>, vector<16x10xf32> -> vector<16x10xf32>
    %c0_7 = arith.constant 0 : index
    %c0_8 = arith.constant 0 : index
    %9 = vector.load %arg4[%c0_7, %c0_8] : memref<16x10xf32, #tpu.memory_space<vmem>>, vector<16x10xf32>
    tpu.vector_store %arg4[%c0_7, %c0_8], %8 {strides = array<i32>} : memref<16x10xf32, #tpu.memory_space<vmem>>, vector<16x10xf32>,
    return
  }
  func.func @transform_0(%arg0: i32) -> (i32, i32) {
    %c0_i32 = arith.constant 0 : i32
    %c0_i32_0 = arith.constant 0 : i32
    return %arg0, %c0_i32 : i32, i32
  }
  func.func @transform_1(%arg0: i32) -> (i32, i32) {
    %c0_i32 = arith.constant 0 : i32
    %c0_i32_0 = arith.constant 0 : i32
    %c0_i32_1 = arith.constant 0 : i32
    return %c0_i32, %c0_i32_0 : i32, i32
  }
  func.func @transform_2(%arg0: i32) -> (i32, i32) {
    %c0_i32 = arith.constant 0 : i32
    %c0_i32_0 = arith.constant 0 : i32
    %c0_i32_1 = arith.constant 0 : i32
    return %c0_i32, %c0_i32_0 : i32, i32
  }
  func.func @transform_3(%arg0: i32) -> (i32, i32) {
    %c0_i32 = arith.constant 0 : i32
    %c0_i32_0 = arith.constant 0 : i32
    return %arg0, %c0_i32 : i32, i32
  }
}

</mosaic_0001>

<llo_original>
// kernel: net_sparse_forward.1
$region0: #{net_sparse_forward.1}
  #allocation0 [shape = 'u32[]', space=smem, size = 0x4, offset = 0x4, fixed_abs, tag = 'smem constant byte address 0x4 - core index']
  #allocation1 [shape = 'u32[72,128]{1,0:T(1,128)}', space=vmem, size = 0x9000, scoped, tag = 'internal scratch']
  %s0 = inlined_call_operand.vmem [shape: f32[32,784], index: 0, kind: input, shape index: {}]
  %s1 = inlined_call_operand.vmem [shape: bf16[784,256], index: 1, kind: input, shape index: {}]
  %s2 = inlined_call_operand.vmem [shape: bf16[256,10], index: 2, kind: input, shape index: {}]
  %s3 = inlined_call_operand.vmem [shape: f32[32,10], index: 3, kind: output, shape index: {}]
  %s4 = sld [smem:[#allocation0]]
  $region45: #{net_sparse_forward.1} parent=0
    _
  %s6 = ssub.s32 1, %s4
  %s7 = scalar_select 0, %s6, %s4
  loop: start=0, step=1, limit=4
  $region2: #{net_sparse_forward.1} parent=0 // loop_pre_header
    _
  $region3: #{net_sparse_forward.1} parent=0 // loop_header
    %s9 = sphi 0, %s13
    %p10 = scmp.ge.s32.totalorder %s9, 4
    %s19 = sphi 0, %s21
    %s22 = sphi 0, %s19
    %s23 = sphi 0, %s22
    %s39 = sphi 0, %s23
    %s43 = sphi 0, %s43
    %s45 = sphi 0, %s43
    %s46 = sphi 0, %s45
    %s60 = sphi 0, %s46
    %s64 = sphi 0, %s64
    %s66 = sphi 0, %s64
    %s67 = sphi 0, %s66
    %s81 = sphi 0, %s67
    %s87 = sphi 0, %s89
    %s90 = sphi 0, %s87
    %s91 = sphi 0, %s90
    %s107 = sphi 0, %s91
  $region4: #{net_sparse_forward.1} parent=0 // loop_header_branch
    %12 = sbr.rel (%p10) target = $region8
  $region5: #{net_sparse_forward.1} parent=0 // loop_body
    %s14 = ssub.s32 %s9, 1
    %s15 = ssub.s32 %s9, 2
    %s16 = sadd.s32 %s9, 1
    %s17 = ssub.s32 %s9, %s16
    %p18 = scmp.eq.s32.totalorder %s17, 0
    %s20 = sadd.s32 %s19, 1
    %s21 = scalar_select %p18, %s19, %s20
    %p24 = pneg %p18
    %p25 = scmp.eq.s32.totalorder %s9, 1
    %p26 = por %p24, %p25
    %p27 = scmp.ne.s32.totalorder %s19, %s22
    %p28 = scmp.eq.s32.totalorder %s9, 0
    %p29 = por %p27, %p28
    %p30 = scmp.ne.s32.totalorder %s19, %s22
    %p31 = scmp.eq.s32.totalorder %s14, 1
    %p32 = por %p30, %p31
    %p33 = scmp.ne.s32.totalorder %s22, %s23
    %p34 = scmp.eq.s32.totalorder %s14, 0
    %p35 = por %p33, %p34
    %p36 = scmp.ne.s32.totalorder %s22, %s23
    %p37 = scmp.eq.s32.totalorder %s15, 1
    %p38 = por %p36, %p37
    %p40 = scmp.ne.s32.totalorder %s23, %s39
    %p41 = scmp.eq.s32.totalorder %s15, 0
    %p42 = por %p40, %p41
    %s44 = sadd.s32 %s43, 1
    %p47 = scmp.eq.s32.totalorder %s9, 1
    %p48 = scmp.ne.s32.totalorder %s43, %s45
    %p49 = scmp.eq.s32.totalorder %s9, 0
    %p50 = por %p48, %p49
    %p51 = scmp.ne.s32.totalorder %s43, %s45
    %p52 = scmp.eq.s32.totalorder %s14, 1
    %p53 = por %p51, %p52
    %p54 = scmp.ne.s32.totalorder %s45, %s46
    %p55 = scmp.eq.s32.totalorder %s14, 0
    %p56 = por %p54, %p55
    %p57 = scmp.ne.s32.totalorder %s45, %s46
    %p58 = scmp.eq.s32.totalorder %s15, 1
    %p59 = por %p57, %p58
    %p61 = scmp.ne.s32.totalorder %s46, %s60
    %p62 = scmp.eq.s32.totalorder %s15, 0
    %p63 = por %p61, %p62
    %s65 = sadd.s32 %s64, 1
    %p68 = scmp.eq.s32.totalorder %s9, 1
    %p69 = scmp.ne.s32.totalorder %s64, %s66
    %p70 = scmp.eq.s32.totalorder %s9, 0
    %p71 = por %p69, %p70
    %p72 = scmp.ne.s32.totalorder %s64, %s66
    %p73 = scmp.eq.s32.totalorder %s14, 1
    %p74 = por %p72, %p73
    %p75 = scmp.ne.s32.totalorder %s66, %s67
    %p76 = scmp.eq.s32.totalorder %s14, 0
    %p77 = por %p75, %p76
    %p78 = scmp.ne.s32.totalorder %s66, %s67
    %p79 = scmp.eq.s32.totalorder %s15, 1
    %p80 = por %p78, %p79
    %p82 = scmp.ne.s32.totalorder %s67, %s81
    %p83 = scmp.eq.s32.totalorder %s15, 0
    %p84 = por %p82, %p83
    %s85 = ssub.s32 %s9, %s16
    %p86 = scmp.eq.s32.totalorder %s85, 0
    %s88 = sadd.s32 %s87, 1
    %s89 = scalar_select %p86, %s87, %s88
    %p92 = pneg %p86
    %p93 = scmp.eq.s32.totalorder %s9, 1
    %p94 = por %p92, %p93
    %p95 = scmp.ne.s32.totalorder %s87, %s90
    %p96 = scmp.eq.s32.totalorder %s9, 0
    %p97 = por %p95, %p96
    %p98 = scmp.ne.s32.totalorder %s87, %s90
    %p99 = scmp.eq.s32.totalorder %s14, 1
    %p100 = por %p98, %p99
    %p101 = scmp.ne.s32.totalorder %s90, %s91
    %p102 = scmp.eq.s32.totalorder %s14, 0
    %p103 = por %p101, %p102
    %p104 = scmp.ne.s32.totalorder %s90, %s91
    %p105 = scmp.eq.s32.totalorder %s15, 1
    %p106 = por %p104, %p105
    %p108 = scmp.ne.s32.totalorder %s91, %s107
    %p109 = scmp.eq.s32.totalorder %s15, 0
    %p110 = por %p108, %p109
    %p111 = scmp.le.s32.totalorder 1, %s9
    %p112 = scmp.lt.s32.totalorder %s9, 3
    %p113 = pnand %p111, %p112
    %p114 = pneg %p113
    // Predicated region
    $region9: #{net_sparse_forward.1} parent=5 // pred_check
      _
    $region10: #{net_sparse_forward.1} parent=5 // pred_check_branch
      %116 = sbr.rel (%p113) target = $region12
    $region11: #{net_sparse_forward.1} parent=5 // pred_region
      %s117 = ssub.s32 %s9, 1
      // Predicated region
      $region13: #{net_sparse_forward.1} parent=11 // pred_check
        %p118 = pneg %p56
      $region14: #{net_sparse_forward.1} parent=11 // pred_check_branch
        %120 = sbr.rel (%p118) target = $region16
      $region15: #{net_sparse_forward.1} parent=11 // pred_region
        _
      $region16: #{net_sparse_forward.1} parent=11 // pred_fallthru
        _
      // Predicated region
      $region17: #{net_sparse_forward.1} parent=11 // pred_check
        %p121 = pneg %p77
      $region18: #{net_sparse_forward.1} parent=11 // pred_check_branch
        %123 = sbr.rel (%p121) target = $region20
      $region19: #{net_sparse_forward.1} parent=11 // pred_region
        _
      $region20: #{net_sparse_forward.1} parent=11 // pred_fallthru
        _
    $region12: #{net_sparse_forward.1} parent=5 // pred_fallthru
      _
    %p124 = scmp.lt.s32.totalorder %s9, 2
    // Predicated region
    $region21: #{net_sparse_forward.1} parent=5 // pred_check
      %p125 = pneg %p124
    $region22: #{net_sparse_forward.1} parent=5 // pred_check_branch
      %127 = sbr.rel (%p125) target = $region24
    $region23: #{net_sparse_forward.1} parent=5 // pred_region
      // Predicated region
      $region25: #{net_sparse_forward.1} parent=23 // pred_check
        %p128 = pneg %p29
      $region26: #{net_sparse_forward.1} parent=23 // pred_check_branch
        %130 = sbr.rel (%p128) target = $region28
      $region27: #{net_sparse_forward.1} parent=23 // pred_region
        %s131 = smul.u32 2, %s9
        %p132 = scmp.lt.s32.totalorder %s131, 3
        %s133 = scalar_select %p132, %s131, 3
        %s134 = smul.addr %s133, 7
        %s135 = smul.addr %s134, 8
        %s136 = scalar_lea.vmem %s0, %s135
        %s137 = smul.u32 2, %s9
      $region28: #{net_sparse_forward.1} parent=23 // pred_fallthru
        _
    $region24: #{net_sparse_forward.1} parent=5 // pred_fallthru
      _
    %p138 = scmp.le.s32.totalorder 1, %s9
    %p139 = scmp.lt.s32.totalorder %s9, 3
    %p140 = pnand %p138, %p139
    %p141 = pneg %p140
    // Predicated region
    $region29: #{net_sparse_forward.1} parent=5 // pred_check
      _
    $region30: #{net_sparse_forward.1} parent=5 // pred_check_branch
      %143 = sbr.rel (%p140) target = $region32
    $region31: #{net_sparse_forward.1} parent=5 // pred_region
      %s144 = ssub.s32 %s9, 1
      %s145 = smul.u32 2, %s14
      %p146 = scmp.lt.s32.totalorder %s145, 3
      %s147 = scalar_select %p146, %s145, 3
      %s148 = smul.addr %s147, 7
      %s149 = smul.addr %s148, 8
      %s150 = scalar_lea.vmem %s0, %s149
      %p151 = pneg %p35
      %p152 = pneg %p32
      %p153 = pneg %p56
      %p154 = pneg %p53
      %p155 = pneg %p77
      %p156 = pneg %p74
      %p157 = pneg %p103
      %p158 = pneg %p100
      %s159 = smul.u32 2, %s14
      %p160 = scmp.lt.s32.totalorder %s159, 3
      %s161 = scalar_select %p160, %s159, 3
      %s162 = smul.addr %s161, 8
      %s163 = scalar_lea.vmem %s3, %s162
      %s164 = smul.u32 2, %s14
      %p165 = scmp.lt.s32.totalorder %s164, 3
      %s166 = scalar_select %p165, %s164, 3
      %s167 = smul.addr %s166, 7
      %s168 = smul.addr %s167, 8
      %s169 = scalar_lea.vmem %s0, %s168
      %s170 = smul.u32 2, %s14
      %s171 = smul.u32 2, %s14
      %p172 = scmp.lt.s32.totalorder %s171, 3
      %s173 = scalar_select %p172, %s171, 3
      %s174 = smul.addr %s173, 8
      %s175 = scalar_lea.vmem %s3, %s174
      %s176 = smul.u32 2, %s14
      %v178 = vld [vmem:[%s169] sm:$0xff]
      %v179 = vld [vmem:[%s169 + $0x8] sm:$0xff]
      %v180 = vld [vmem:[%s169 + $0x10] sm:$0xff]
      %v181 = vld [vmem:[%s169 + $0x18] sm:$0xff]
      %v182 = vld [vmem:[%s169 + $0x20] sm:$0xff]
      %v183 = vld [vmem:[%s169 + $0x28] sm:$0xff]
      %v184 = vld [vmem:[%s169 + $0x30] sm:$0xff]
      %v185 = vld [vmem:[%s169 + $0x38] sm:$0xff]
      %v186 = vld [vmem:[%s169 + $0x40] sm:$0xff]
      %v187 = vld [vmem:[%s169 + $0x48] sm:$0xff]
      %v188 = vld [vmem:[%s169 + $0x50] sm:$0xff]
      %v189 = vld [vmem:[%s169 + $0x58] sm:$0xff]
      %v190 = vld [vmem:[%s169 + $0x60] sm:$0xff]
      %v191 = vld [vmem:[%s169 + $0x68] sm:$0xff]
      %v192 = vpack.c.bf16 %v185, %v178
      %v193 = vpack.c.bf16 %v186, %v179
      %v194 = vpack.c.bf16 %v187, %v180
      %v195 = vpack.c.bf16 %v188, %v181
      %v196 = vpack.c.bf16 %v189, %v182
      %v197 = vpack.c.bf16 %v190, %v183
      %v198 = vpack.c.bf16 %v191, %v184
      %v199 = vld [vmem:[%s1] sm:$0xff]
      %v200 = vld [vmem:[%s1 + $0x8] sm:$0xff]
      %v201 = vld [vmem:[%s1 + $0x10] sm:$0xff]
      %v202 = vld [vmem:[%s1 + $0x18] sm:$0xff]
      %v203 = vld [vmem:[%s1 + $0x20] sm:$0xff]
      %v204 = vld [vmem:[%s1 + $0x28] sm:$0xff]
      %v205 = vld [vmem:[%s1 + $0x30] sm:$0xff]
      %v206 = vld [vmem:[%s1 + $0x38] sm:$0xff]
      %v207 = vld [vmem:[%s1 + $0x40] sm:$0xff]
      %v208 = vld [vmem:[%s1 + $0x48] sm:$0xff]
      %v209 = vld [vmem:[%s1 + $0x50] sm:$0xff]
      %v210 = vld [vmem:[%s1 + $0x58] sm:$0xff]
      %v211 = vld [vmem:[%s1 + $0x60] sm:$0xff]
      %v212 = vld [vmem:[%s1 + $0x68] sm:$0xff]
      %v213 = vld [vmem:[%s1 + $0x70] sm:$0xff]
      %v214 = vld [vmem:[%s1 + $0x78] sm:$0xff]
      %v215 = vld [vmem:[%s1 + $0x80] sm:$0xff]
      %v216 = vld [vmem:[%s1 + $0x88] sm:$0xff]
      %v217 = vld [vmem:[%s1 + $0x90] sm:$0xff]
      %v218 = vld [vmem:[%s1 + $0x98] sm:$0xff]
      %v219 = vld [vmem:[%s1 + $0xa0] sm:$0xff]
      %v220 = vld [vmem:[%s1 + $0xa8] sm:$0xff]
      %v221 = vld [vmem:[%s1 + $0xb0] sm:$0xff]
      %v222 = vld [vmem:[%s1 + $0xb8] sm:$0xff]
      %v223 = vld [vmem:[%s1 + $0xc0] sm:$0xff]
      %v224 = vld [vmem:[%s1 + $0xc8] sm:$0xff]
      %v225 = vld [vmem:[%s1 + $0xd0] sm:$0xff]
      %v226 = vld [vmem:[%s1 + $0xd8] sm:$0xff]
      %v227 = vld [vmem:[%s1 + $0xe0] sm:$0xff]
      %v228 = vld [vmem:[%s1 + $0xe8] sm:$0xff]
      %v229 = vld [vmem:[%s1 + $0xf0] sm:$0xff]
      %v230 = vld [vmem:[%s1 + $0xf8] sm:$0xff]
      %v231 = vld [vmem:[%s1 + $0x100] sm:$0xff]
      %v232 = vld [vmem:[%s1 + $0x108] sm:$0xff]
      %v233 = vld [vmem:[%s1 + $0x110] sm:$0xff]
      %v234 = vld [vmem:[%s1 + $0x118] sm:$0xff]
      %v235 = vld [vmem:[%s1 + $0x120] sm:$0xff]
      %v236 = vld [vmem:[%s1 + $0x128] sm:$0xff]
      %v237 = vld [vmem:[%s1 + $0x130] sm:$0xff]
      %v238 = vld [vmem:[%s1 + $0x138] sm:$0xff]
      %v239 = vld [vmem:[%s1 + $0x140] sm:$0xff]
      %v240 = vld [vmem:[%s1 + $0x148] sm:$0xff]
      %v241 = vld [vmem:[%s1 + $0x150] sm:$0xff]
      %v242 = vld [vmem:[%s1 + $0x158] sm:$0xff]
      %v243 = vld [vmem:[%s1 + $0x160] sm:$0xff]
      %v244 = vld [vmem:[%s1 + $0x168] sm:$0xff]
      %v245 = vld [vmem:[%s1 + $0x170] sm:$0xff]
      %v246 = vld [vmem:[%s1 + $0x178] sm:$0xff]
      %v247 = vld [vmem:[%s1 + $0x180] sm:$0xff]
      %v248 = vld [vmem:[%s1 + $0x188] sm:$0xff]
      %v249 = vld [vmem:[%s1 + $0x190] sm:$0xff]
      %v250 = vld [vmem:[%s1 + $0x198] sm:$0xff]
      %v251 = vld [vmem:[%s1 + $0x1a0] sm:$0xff]
      %v252 = vld [vmem:[%s1 + $0x1a8] sm:$0xff]
      %v253 = vld [vmem:[%s1 + $0x1b0] sm:$0xff]
      %v254 = vld [vmem:[%s1 + $0x1b8] sm:$0xff]
      %v255 = vld [vmem:[%s1 + $0x1c0] sm:$0xff]
      %v256 = vld [vmem:[%s1 + $0x1c8] sm:$0xff]
      %v257 = vld [vmem:[%s1 + $0x1d0] sm:$0xff]
      %v258 = vld [vmem:[%s1 + $0x1d8] sm:$0xff]
      %v259 = vld [vmem:[%s1 + $0x1e0] sm:$0xff]
      %v260 = vld [vmem:[%s1 + $0x1e8] sm:$0xff]
      %v261 = vld [vmem:[%s1 + $0x1f0] sm:$0xff]
      %v262 = vld [vmem:[%s1 + $0x1f8] sm:$0xff]
      %v263 = vld [vmem:[%s1 + $0x200] sm:$0xff]
      %v264 = vld [vmem:[%s1 + $0x208] sm:$0xff]
      %v265 = vld [vmem:[%s1 + $0x210] sm:$0xff]
      %v266 = vld [vmem:[%s1 + $0x218] sm:$0xff]
      %v267 = vld [vmem:[%s1 + $0x220] sm:$0xff]
      %v268 = vld [vmem:[%s1 + $0x228] sm:$0xff]
      %v269 = vld [vmem:[%s1 + $0x230] sm:$0xff]
      %v270 = vld [vmem:[%s1 + $0x238] sm:$0xff]
      %v271 = vld [vmem:[%s1 + $0x240] sm:$0xff]
      %v272 = vld [vmem:[%s1 + $0x248] sm:$0xff]
      %v273 = vld [vmem:[%s1 + $0x250] sm:$0xff]
      %v274 = vld [vmem:[%s1 + $0x258] sm:$0xff]
      %v275 = vld [vmem:[%s1 + $0x260] sm:$0xff]
      %v276 = vld [vmem:[%s1 + $0x268] sm:$0xff]
      %v277 = vld [vmem:[%s1 + $0x270] sm:$0xff]
      %v278 = vld [vmem:[%s1 + $0x278] sm:$0xff]
      %v279 = vld [vmem:[%s1 + $0x280] sm:$0xff]
      %v280 = vld [vmem:[%s1 + $0x288] sm:$0xff]
      %v281 = vld [vmem:[%s1 + $0x290] sm:$0xff]
      %v282 = vld [vmem:[%s1 + $0x298] sm:$0xff]
      %v283 = vld [vmem:[%s1 + $0x2a0] sm:$0xff]
      %v284 = vld [vmem:[%s1 + $0x2a8] sm:$0xff]
      %v285 = vld [vmem:[%s1 + $0x2b0] sm:$0xff]
      %v286 = vld [vmem:[%s1 + $0x2b8] sm:$0xff]
      %v287 = vld [vmem:[%s1 + $0x2c0] sm:$0xff]
      %v288 = vld [vmem:[%s1 + $0x2c8] sm:$0xff]
      %v289 = vld [vmem:[%s1 + $0x2d0] sm:$0xff]
      %v290 = vld [vmem:[%s1 + $0x2d8] sm:$0xff]
      %v291 = vld [vmem:[%s1 + $0x2e0] sm:$0xff]
      %v292 = vld [vmem:[%s1 + $0x2e8] sm:$0xff]
      %v293 = vld [vmem:[%s1 + $0x2f0] sm:$0xff]
      %v294 = vld [vmem:[%s1 + $0x2f8] sm:$0xff]
      %v295 = vld [vmem:[%s1 + $0x300] sm:$0xff]
      %v296 = vld [vmem:[%s1 + $0x308] sm:$0xff]
      %v395 = vunpack.c.l.b16 %v199
      %v396 = vunpack.c.h.b16 %v199
      %v397 = vunpack.c.l.b16 %v200
      %v398 = vunpack.c.h.b16 %v200
      %v399 = vunpack.c.l.b16 %v201
      %v400 = vunpack.c.h.b16 %v201
      %v401 = vunpack.c.l.b16 %v202
      %v402 = vunpack.c.h.b16 %v202
      %v403 = vunpack.c.l.b16 %v203
      %v404 = vunpack.c.h.b16 %v203
      %v405 = vunpack.c.l.b16 %v204
      %v406 = vunpack.c.h.b16 %v204
      %v407 = vunpack.c.l.b16 %v205
      %v408 = vunpack.c.h.b16 %v205
      %v409 = vunpack.c.l.b16 %v206
      %v410 = vunpack.c.h.b16 %v206
      %v411 = vunpack.c.l.b16 %v207
      %v412 = vunpack.c.h.b16 %v207
      %v413 = vunpack.c.l.b16 %v208
      %v414 = vunpack.c.h.b16 %v208
      %v415 = vunpack.c.l.b16 %v209
      %v416 = vunpack.c.h.b16 %v209
      %v417 = vunpack.c.l.b16 %v210
      %v418 = vunpack.c.h.b16 %v210
      %v419 = vunpack.c.l.b16 %v211
      %v420 = vunpack.c.h.b16 %v211
      %v421 = vunpack.c.l.b16 %v212
      %v422 = vunpack.c.h.b16 %v212
      %v423 = vunpack.c.l.b16 %v213
      %v424 = vunpack.c.h.b16 %v213
      %v425 = vunpack.c.l.b16 %v214
      %v426 = vunpack.c.h.b16 %v214
      %v427 = vunpack.c.l.b16 %v215
      %v428 = vunpack.c.h.b16 %v215
      %v429 = vunpack.c.l.b16 %v216
      %v430 = vunpack.c.h.b16 %v216
      %v431 = vunpack.c.l.b16 %v217
      %v432 = vunpack.c.h.b16 %v217
      %v433 = vunpack.c.l.b16 %v218
      %v434 = vunpack.c.h.b16 %v218
      %v435 = vunpack.c.l.b16 %v219
      %v436 = vunpack.c.h.b16 %v219
      %v437 = vunpack.c.l.b16 %v220
      %v438 = vunpack.c.h.b16 %v220
      %v439 = vunpack.c.l.b16 %v221
      %v440 = vunpack.c.h.b16 %v221
      %v441 = vunpack.c.l.b16 %v222
      %v442 = vunpack.c.h.b16 %v222
      %v443 = vunpack.c.l.b16 %v223
      %v444 = vunpack.c.h.b16 %v223
      %v445 = vunpack.c.l.b16 %v224
      %v446 = vunpack.c.h.b16 %v224
      %v447 = vunpack.c.l.b16 %v225
      %v448 = vunpack.c.h.b16 %v225
      %v449 = vunpack.c.l.b16 %v226
      %v450 = vunpack.c.h.b16 %v226
      %v451 = vunpack.c.l.b16 %v227
      %v452 = vunpack.c.h.b16 %v227
      %v453 = vunpack.c.l.b16 %v228
      %v454 = vunpack.c.h.b16 %v228
      %v455 = vunpack.c.l.b16 %v229
      %v456 = vunpack.c.h.b16 %v229
      %v457 = vunpack.c.l.b16 %v230
      %v458 = vunpack.c.h.b16 %v230
      %v459 = vunpack.c.l.b16 %v231
      %v460 = vunpack.c.h.b16 %v231
      %v461 = vunpack.c.l.b16 %v232
      %v462 = vunpack.c.h.b16 %v232
      %v463 = vunpack.c.l.b16 %v233
      %v464 = vunpack.c.h.b16 %v233
      %v465 = vunpack.c.l.b16 %v234
      %v466 = vunpack.c.h.b16 %v234
      %v467 = vunpack.c.l.b16 %v235
      %v468 = vunpack.c.h.b16 %v235
      %v469 = vunpack.c.l.b16 %v236
      %v470 = vunpack.c.h.b16 %v236
      %v471 = vunpack.c.l.b16 %v237
      %v472 = vunpack.c.h.b16 %v237
      %v473 = vunpack.c.l.b16 %v238
      %v474 = vunpack.c.h.b16 %v238
      %v475 = vunpack.c.l.b16 %v239
      %v476 = vunpack.c.h.b16 %v239
      %v477 = vunpack.c.l.b16 %v240
      %v478 = vunpack.c.h.b16 %v240
      %v479 = vunpack.c.l.b16 %v241
      %v480 = vunpack.c.h.b16 %v241
      %v481 = vunpack.c.l.b16 %v242
      %v482 = vunpack.c.h.b16 %v242
      %v483 = vunpack.c.l.b16 %v243
      %v484 = vunpack.c.h.b16 %v243
      %v485 = vunpack.c.l.b16 %v244
      %v486 = vunpack.c.h.b16 %v244
      %v487 = vunpack.c.l.b16 %v245
      %v488 = vunpack.c.h.b16 %v245
      %v489 = vunpack.c.l.b16 %v246
      %v490 = vunpack.c.h.b16 %v246
      %v491 = vunpack.c.l.b16 %v247
      %v492 = vunpack.c.h.b16 %v247
      %v493 = vunpack.c.l.b16 %v248
      %v494 = vunpack.c.h.b16 %v248
      %v495 = vunpack.c.l.b16 %v249
      %v496 = vunpack.c.h.b16 %v249
      %v497 = vunpack.c.l.b16 %v250
      %v498 = vunpack.c.h.b16 %v250
      %v499 = vunpack.c.l.b16 %v251
      %v500 = vunpack.c.h.b16 %v251
      %v501 = vunpack.c.l.b16 %v252
      %v502 = vunpack.c.h.b16 %v252
      %v503 = vunpack.c.l.b16 %v253
      %v504 = vunpack.c.h.b16 %v253
      %v505 = vunpack.c.l.b16 %v254
      %v506 = vunpack.c.h.b16 %v254
      %v507 = vunpack.c.l.b16 %v255
      %v508 = vunpack.c.h.b16 %v255
      %v509 = vunpack.c.l.b16 %v256
      %v510 = vunpack.c.h.b16 %v256
      %v511 = vunpack.c.l.b16 %v257
      %v512 = vunpack.c.h.b16 %v257
      %v513 = vunpack.c.l.b16 %v258
      %v514 = vunpack.c.h.b16 %v258
      %v515 = vunpack.c.l.b16 %v259
      %v516 = vunpack.c.h.b16 %v259
      %v517 = vunpack.c.l.b16 %v260
      %v518 = vunpack.c.h.b16 %v260
      %v519 = vunpack.c.l.b16 %v261
      %v520 = vunpack.c.h.b16 %v261
      %v521 = vunpack.c.l.b16 %v262
      %v522 = vunpack.c.h.b16 %v262
      %v523 = vunpack.c.l.b16 %v263
      %v524 = vunpack.c.h.b16 %v263
      %v525 = vunpack.c.l.b16 %v264
      %v526 = vunpack.c.h.b16 %v264
      %v527 = vunpack.c.l.b16 %v265
      %v528 = vunpack.c.h.b16 %v265
      %v529 = vunpack.c.l.b16 %v266
      %v530 = vunpack.c.h.b16 %v266
      %v531 = vunpack.c.l.b16 %v267
      %v532 = vunpack.c.h.b16 %v267
      %v533 = vunpack.c.l.b16 %v268
      %v534 = vunpack.c.h.b16 %v268
      %v535 = vunpack.c.l.b16 %v269
      %v536 = vunpack.c.h.b16 %v269
      %v537 = vunpack.c.l.b16 %v270
      %v538 = vunpack.c.h.b16 %v270
      %v539 = vunpack.c.l.b16 %v271
      %v540 = vunpack.c.h.b16 %v271
      %v541 = vunpack.c.l.b16 %v272
      %v542 = vunpack.c.h.b16 %v272
      %v543 = vunpack.c.l.b16 %v273
      %v544 = vunpack.c.h.b16 %v273
      %v545 = vunpack.c.l.b16 %v274
      %v546 = vunpack.c.h.b16 %v274
      %v547 = vunpack.c.l.b16 %v275
      %v548 = vunpack.c.h.b16 %v275
      %v549 = vunpack.c.l.b16 %v276
      %v550 = vunpack.c.h.b16 %v276
      %v551 = vunpack.c.l.b16 %v277
      %v552 = vunpack.c.h.b16 %v277
      %v553 = vunpack.c.l.b16 %v278
      %v554 = vunpack.c.h.b16 %v278
      %v555 = vunpack.c.l.b16 %v279
      %v556 = vunpack.c.h.b16 %v279
      %v557 = vunpack.c.l.b16 %v280
      %v558 = vunpack.c.h.b16 %v280
      %v559 = vunpack.c.l.b16 %v281
      %v560 = vunpack.c.h.b16 %v281
      %v561 = vunpack.c.l.b16 %v282
      %v562 = vunpack.c.h.b16 %v282
      %v563 = vunpack.c.l.b16 %v283
      %v564 = vunpack.c.h.b16 %v283
      %v565 = vunpack.c.l.b16 %v284
      %v566 = vunpack.c.h.b16 %v284
      %v567 = vunpack.c.l.b16 %v285
      %v568 = vunpack.c.h.b16 %v285
      %v569 = vunpack.c.l.b16 %v286
      %v570 = vunpack.c.h.b16 %v286
      %v571 = vunpack.c.l.b16 %v287
      %v572 = vunpack.c.h.b16 %v287
      %v573 = vunpack.c.l.b16 %v288
      %v574 = vunpack.c.h.b16 %v288
      %v575 = vunpack.c.l.b16 %v289
      %v576 = vunpack.c.h.b16 %v289
      %v577 = vunpack.c.l.b16 %v290
      %v578 = vunpack.c.h.b16 %v290
      %v579 = vunpack.c.l.b16 %v291
      %v580 = vunpack.c.h.b16 %v291
      %v581 = vunpack.c.l.b16 %v292
      %v582 = vunpack.c.h.b16 %v292
      %v583 = vunpack.c.l.b16 %v293
      %v584 = vunpack.c.h.b16 %v293
      %v585 = vunpack.c.l.b16 %v294
      %v586 = vunpack.c.h.b16 %v294
      %v587 = vunpack.c.l.b16 %v295
      %v588 = vunpack.c.h.b16 %v295
      %v589 = vunpack.c.l.b16 %v296
      %v590 = vunpack.c.h.b16 %v296
      %v591 = vpack.c.b16 %v397, %v395
      %v592 = vpack.c.b16 %v398, %v396
      %v593 = vpack.c.b16 %v401, %v399
      %v594 = vpack.c.b16 %v402, %v400
      %v595 = vpack.c.b16 %v405, %v403
      %v596 = vpack.c.b16 %v406, %v404
      %v597 = vpack.c.b16 %v409, %v407
      %v598 = vpack.c.b16 %v410, %v408
      %v599 = vpack.c.b16 %v413, %v411
      %v600 = vpack.c.b16 %v414, %v412
      %v601 = vpack.c.b16 %v417, %v415
      %v602 = vpack.c.b16 %v418, %v416
      %v603 = vpack.c.b16 %v421, %v419
      %v604 = vpack.c.b16 %v422, %v420
      %v605 = vpack.c.b16 %v425, %v423
      %v606 = vpack.c.b16 %v426, %v424
      %v607 = vpack.c.b16 %v429, %v427
      %v608 = vpack.c.b16 %v430, %v428
      %v609 = vpack.c.b16 %v433, %v431
      %v610 = vpack.c.b16 %v434, %v432
      %v611 = vpack.c.b16 %v437, %v435
      %v612 = vpack.c.b16 %v438, %v436
      %v613 = vpack.c.b16 %v441, %v439
      %v614 = vpack.c.b16 %v442, %v440
      %v615 = vpack.c.b16 %v445, %v443
      %v616 = vpack.c.b16 %v446, %v444
      %v617 = vpack.c.b16 %v449, %v447
      %v618 = vpack.c.b16 %v450, %v448
      %v619 = vpack.c.b16 %v453, %v451
      %v620 = vpack.c.b16 %v454, %v452
      %v621 = vpack.c.b16 %v457, %v455
      %v622 = vpack.c.b16 %v458, %v456
      %v623 = vpack.c.b16 %v461, %v459
      %v624 = vpack.c.b16 %v462, %v460
      %v625 = vpack.c.b16 %v465, %v463
      %v626 = vpack.c.b16 %v466, %v464
      %v627 = vpack.c.b16 %v469, %v467
      %v628 = vpack.c.b16 %v470, %v468
      %v629 = vpack.c.b16 %v473, %v471
      %v630 = vpack.c.b16 %v474, %v472
      %v631 = vpack.c.b16 %v477, %v475
      %v632 = vpack.c.b16 %v478, %v476
      %v633 = vpack.c.b16 %v481, %v479
      %v634 = vpack.c.b16 %v482, %v480
      %v635 = vpack.c.b16 %v485, %v483
      %v636 = vpack.c.b16 %v486, %v484
      %v637 = vpack.c.b16 %v489, %v487
      %v638 = vpack.c.b16 %v490, %v488
      %v639 = vpack.c.b16 %v493, %v491
      %v640 = vpack.c.b16 %v494, %v492
      %v641 = vpack.c.b16 %v497, %v495
      %v642 = vpack.c.b16 %v498, %v496
      %v643 = vpack.c.b16 %v501, %v499
      %v644 = vpack.c.b16 %v502, %v500
      %v645 = vpack.c.b16 %v505, %v503
      %v646 = vpack.c.b16 %v506, %v504
      %v647 = vpack.c.b16 %v509, %v507
      %v648 = vpack.c.b16 %v510, %v508
      %v649 = vpack.c.b16 %v513, %v511
      %v650 = vpack.c.b16 %v514, %v512
      %v651 = vpack.c.b16 %v517, %v515
      %v652 = vpack.c.b16 %v518, %v516
      %v653 = vpack.c.b16 %v521, %v519
      %v654 = vpack.c.b16 %v522, %v520
      %v655 = vpack.c.b16 %v525, %v523
      %v656 = vpack.c.b16 %v526, %v524
      %v657 = vpack.c.b16 %v529, %v527
      %v658 = vpack.c.b16 %v530, %v528
      %v659 = vpack.c.b16 %v533, %v531
      %v660 = vpack.c.b16 %v534, %v532
      %v661 = vpack.c.b16 %v537, %v535
      %v662 = vpack.c.b16 %v538, %v536
      %v663 = vpack.c.b16 %v541, %v539
      %v664 = vpack.c.b16 %v542, %v540
      %v665 = vpack.c.b16 %v545, %v543
      %v666 = vpack.c.b16 %v546, %v544
      %v667 = vpack.c.b16 %v549, %v547
      %v668 = vpack.c.b16 %v550, %v548
      %v669 = vpack.c.b16 %v553, %v551
      %v670 = vpack.c.b16 %v554, %v552
      %v671 = vpack.c.b16 %v557, %v555
      %v672 = vpack.c.b16 %v558, %v556
      %v673 = vpack.c.b16 %v561, %v559
      %v674 = vpack.c.b16 %v562, %v560
      %v675 = vpack.c.b16 %v565, %v563
      %v676 = vpack.c.b16 %v566, %v564
      %v677 = vpack.c.b16 %v569, %v567
      %v678 = vpack.c.b16 %v570, %v568
      %v679 = vpack.c.b16 %v573, %v571
      %v680 = vpack.c.b16 %v574, %v572
      %v681 = vpack.c.b16 %v577, %v575
      %v682 = vpack.c.b16 %v578, %v576
      %v683 = vpack.c.b16 %v581, %v579
      %v684 = vpack.c.b16 %v582, %v580
      %v685 = vpack.c.b16 %v585, %v583
      %v686 = vpack.c.b16 %v586, %v584
      %v687 = vpack.c.b16 %v589, %v587
      %v688 = vpack.c.b16 %v590, %v588
      %vm787 = vcmask 130048
      %v789 = vsel %vm787, %v198, 0
      %791 = vmatpush.bf16.msra.mxu0 %v605
      %792 = vmatpush.bf16.msra.mxu0 %v603
      %793 = vmatpush.bf16.msra.mxu0 %v601
      %794 = vmatpush.bf16.msra.mxu0 %v599
      %795 = vmatpush.bf16.msra.mxu0 %v597
      %796 = vmatpush.bf16.msra.mxu0 %v595
      %797 = vmatpush.bf16.msra.mxu0 %v593
      %798 = vmatpush.bf16.msra.mxu0 %v591
      %799 = vmatmul.bf16.gmra.mxu0 %v192
      %v800 = vpop.f32.mrf.mxu0
      %v801 = vadd.f32 0.0, %v800
      %v802 = vpop.f32.mrf.mxu0
      %v803 = vadd.f32 0.0, %v802
      %804 = vdwg.mxu0
      %805 = vmatpush.bf16.msra.mxu0 %v621
      %806 = vmatpush.bf16.msra.mxu0 %v619
      %807 = vmatpush.bf16.msra.mxu0 %v617
      %808 = vmatpush.bf16.msra.mxu0 %v615
      %809 = vmatpush.bf16.msra.mxu0 %v613
      %810 = vmatpush.bf16.msra.mxu0 %v611
      %811 = vmatpush.bf16.msra.mxu0 %v609
      %812 = vmatpush.bf16.msra.mxu0 %v607
      %813 = vmatmul.bf16.gmra.mxu0 %v193
      %v814 = vpop.f32.mrf.mxu0
      %v815 = vadd.f32 %v801, %v814
      %v816 = vpop.f32.mrf.mxu0
      %v817 = vadd.f32 %v803, %v816
      %818 = vdwg.mxu0
      %819 = vmatpush.bf16.msra.mxu0 %v637
      %820 = vmatpush.bf16.msra.mxu0 %v635
      %821 = vmatpush.bf16.msra.mxu0 %v633
      %822 = vmatpush.bf16.msra.mxu0 %v631
      %823 = vmatpush.bf16.msra.mxu0 %v629
      %824 = vmatpush.bf16.msra.mxu0 %v627
      %825 = vmatpush.bf16.msra.mxu0 %v625
      %826 = vmatpush.bf16.msra.mxu0 %v623
      %827 = vmatmul.bf16.gmra.mxu0 %v194
      %v828 = vpop.f32.mrf.mxu0
      %v829 = vadd.f32 %v815, %v828
      %v830 = vpop.f32.mrf.mxu0
      %v831 = vadd.f32 %v817, %v830
      %832 = vdwg.mxu0
      %833 = vmatpush.bf16.msra.mxu0 %v653
      %834 = vmatpush.bf16.msra.mxu0 %v651
      %835 = vmatpush.bf16.msra.mxu0 %v649
      %836 = vmatpush.bf16.msra.mxu0 %v647
      %837 = vmatpush.bf16.msra.mxu0 %v645
      %838 = vmatpush.bf16.msra.mxu0 %v643
      %839 = vmatpush.bf16.msra.mxu0 %v641
      %840 = vmatpush.bf16.msra.mxu0 %v639
      %841 = vmatmul.bf16.gmra.mxu0 %v195
      %v842 = vpop.f32.mrf.mxu0
      %v843 = vadd.f32 %v829, %v842
      %v844 = vpop.f32.mrf.mxu0
      %v845 = vadd.f32 %v831, %v844
      %846 = vdwg.mxu0
      %847 = vmatpush.bf16.msra.mxu0 %v669
      %848 = vmatpush.bf16.msra.mxu0 %v667
      %849 = vmatpush.bf16.msra.mxu0 %v665
      %850 = vmatpush.bf16.msra.mxu0 %v663
      %851 = vmatpush.bf16.msra.mxu0 %v661
      %852 = vmatpush.bf16.msra.mxu0 %v659
      %853 = vmatpush.bf16.msra.mxu0 %v657
      %854 = vmatpush.bf16.msra.mxu0 %v655
      %855 = vmatmul.bf16.gmra.mxu0 %v196
      %v856 = vpop.f32.mrf.mxu0
      %v857 = vadd.f32 %v843, %v856
      %v858 = vpop.f32.mrf.mxu0
      %v859 = vadd.f32 %v845, %v858
      %860 = vdwg.mxu0
      %861 = vmatpush.bf16.msra.mxu0 %v685
      %862 = vmatpush.bf16.msra.mxu0 %v683
      %863 = vmatpush.bf16.msra.mxu0 %v681
      %864 = vmatpush.bf16.msra.mxu0 %v679
      %865 = vmatpush.bf16.msra.mxu0 %v677
      %866 = vmatpush.bf16.msra.mxu0 %v675
      %867 = vmatpush.bf16.msra.mxu0 %v673
      %868 = vmatpush.bf16.msra.mxu0 %v671
      %869 = vmatmul.bf16.gmra.mxu0 %v197
      %v870 = vpop.f32.mrf.mxu0
      %v871 = vadd.f32 %v857, %v870
      %v872 = vpop.f32.mrf.mxu0
      %v873 = vadd.f32 %v859, %v872
      %874 = vdwg.mxu0
      %875 = vmatpush.bf16.msra.mxu0 0
      %876 = vmatpush.bf16.msra.mxu0 0
      %877 = vmatpush.bf16.msra.mxu0 0
      %878 = vmatpush.bf16.msra.mxu0 0
      %879 = vmatpush.bf16.msra.mxu0 0
      %880 = vmatpush.bf16.msra.mxu0 0
      %881 = vmatpush.bf16.msra.mxu0 0
      %882 = vmatpush.bf16.msra.mxu0 %v687
      %883 = vmatmul.bf16.gmra.mxu0 %v789
      %v884 = vpop.f32.mrf.mxu0
      %v885 = vadd.f32 %v871, %v884
      %v886 = vpop.f32.mrf.mxu0
      %v887 = vadd.f32 %v873, %v886
      %888 = vdwg.mxu0
      %889 = vmatpush.bf16.msra.mxu0 %v606
      %890 = vmatpush.bf16.msra.mxu0 %v604
      %891 = vmatpush.bf16.msra.mxu0 %v602
      %892 = vmatpush.bf16.msra.mxu0 %v600
      %893 = vmatpush.bf16.msra.mxu0 %v598
      %894 = vmatpush.bf16.msra.mxu0 %v596
      %895 = vmatpush.bf16.msra.mxu0 %v594
      %896 = vmatpush.bf16.msra.mxu0 %v592
      %897 = vmatmul.bf16.gmra.mxu0 %v192
      %v898 = vpop.f32.mrf.mxu0
      %v899 = vadd.f32 0.0, %v898
      %v900 = vpop.f32.mrf.mxu0
      %v901 = vadd.f32 0.0, %v900
      %902 = vdwg.mxu0
      %903 = vmatpush.bf16.msra.mxu0 %v622
      %904 = vmatpush.bf16.msra.mxu0 %v620
      %905 = vmatpush.bf16.msra.mxu0 %v618
      %906 = vmatpush.bf16.msra.mxu0 %v616
      %907 = vmatpush.bf16.msra.mxu0 %v614
      %908 = vmatpush.bf16.msra.mxu0 %v612
      %909 = vmatpush.bf16.msra.mxu0 %v610
      %910 = vmatpush.bf16.msra.mxu0 %v608
      %911 = vmatmul.bf16.gmra.mxu0 %v193
      %v912 = vpop.f32.mrf.mxu0
      %v913 = vadd.f32 %v899, %v912
      %v914 = vpop.f32.mrf.mxu0
      %v915 = vadd.f32 %v901, %v914
      %916 = vdwg.mxu0
      %917 = vmatpush.bf16.msra.mxu0 %v638
      %918 = vmatpush.bf16.msra.mxu0 %v636
      %919 = vmatpush.bf16.msra.mxu0 %v634
      %920 = vmatpush.bf16.msra.mxu0 %v632
      %921 = vmatpush.bf16.msra.mxu0 %v630
      %922 = vmatpush.bf16.msra.mxu0 %v628
      %923 = vmatpush.bf16.msra.mxu0 %v626
      %924 = vmatpush.bf16.msra.mxu0 %v624
      %925 = vmatmul.bf16.gmra.mxu0 %v194
      %v926 = vpop.f32.mrf.mxu0
      %v927 = vadd.f32 %v913, %v926
      %v928 = vpop.f32.mrf.mxu0
      %v929 = vadd.f32 %v915, %v928
      %930 = vdwg.mxu0
      %931 = vmatpush.bf16.msra.mxu0 %v654
      %932 = vmatpush.bf16.msra.mxu0 %v652
      %933 = vmatpush.bf16.msra.mxu0 %v650
      %934 = vmatpush.bf16.msra.mxu0 %v648
      %935 = vmatpush.bf16.msra.mxu0 %v646
      %936 = vmatpush.bf16.msra.mxu0 %v644
      %937 = vmatpush.bf16.msra.mxu0 %v642
      %938 = vmatpush.bf16.msra.mxu0 %v640
      %939 = vmatmul.bf16.gmra.mxu0 %v195
      %v940 = vpop.f32.mrf.mxu0
      %v941 = vadd.f32 %v927, %v940
      %v942 = vpop.f32.mrf.mxu0
      %v943 = vadd.f32 %v929, %v942
      %944 = vdwg.mxu0
      %945 = vmatpush.bf16.msra.mxu0 %v670
      %946 = vmatpush.bf16.msra.mxu0 %v668
      %947 = vmatpush.bf16.msra.mxu0 %v666
      %948 = vmatpush.bf16.msra.mxu0 %v664
      %949 = vmatpush.bf16.msra.mxu0 %v662
      %950 = vmatpush.bf16.msra.mxu0 %v660
      %951 = vmatpush.bf16.msra.mxu0 %v658
      %952 = vmatpush.bf16.msra.mxu0 %v656
      %953 = vmatmul.bf16.gmra.mxu0 %v196
      %v954 = vpop.f32.mrf.mxu0
      %v955 = vadd.f32 %v941, %v954
      %v956 = vpop.f32.mrf.mxu0
      %v957 = vadd.f32 %v943, %v956
      %958 = vdwg.mxu0
      %959 = vmatpush.bf16.msra.mxu0 %v686
      %960 = vmatpush.bf16.msra.mxu0 %v684
      %961 = vmatpush.bf16.msra.mxu0 %v682
      %962 = vmatpush.bf16.msra.mxu0 %v680
      %963 = vmatpush.bf16.msra.mxu0 %v678
      %964 = vmatpush.bf16.msra.mxu0 %v676
      %965 = vmatpush.bf16.msra.mxu0 %v674
      %966 = vmatpush.bf16.msra.mxu0 %v672
      %967 = vmatmul.bf16.gmra.mxu0 %v197
      %v968 = vpop.f32.mrf.mxu0
      %v969 = vadd.f32 %v955, %v968
      %v970 = vpop.f32.mrf.mxu0
      %v971 = vadd.f32 %v957, %v970
      %972 = vdwg.mxu0
      %973 = vmatpush.bf16.msra.mxu0 0
      %974 = vmatpush.bf16.msra.mxu0 0
      %975 = vmatpush.bf16.msra.mxu0 0
      %976 = vmatpush.bf16.msra.mxu0 0
      %977 = vmatpush.bf16.msra.mxu0 0
      %978 = vmatpush.bf16.msra.mxu0 0
      %979 = vmatpush.bf16.msra.mxu0 0
      %980 = vmatpush.bf16.msra.mxu0 %v688
      %981 = vmatmul.bf16.gmra.mxu0 %v789
      %v982 = vpop.f32.mrf.mxu0
      %v983 = vadd.f32 %v969, %v982
      %v984 = vpop.f32.mrf.mxu0
      %v985 = vadd.f32 %v971, %v984
      %986 = vdwg.mxu0
      %v987 = vmax.f32 %v885, 0.0
      %v988 = vmax.f32 %v983, 0.0
      %v989 = vmax.f32 %v887, 0.0
      %v990 = vmax.f32 %v985, 0.0
      %v991 = vpack.c.bf16 %v989, %v987
      %v992 = vpack.c.bf16 %v990, %v988
      %v993 = vld [vmem:[%s2] sm:$0xf]
      %v994 = vld [vmem:[%s2 + $0x4] sm:$0xf]
      %v995 = vld [vmem:[%s2 + $0x8] sm:$0xf]
      %v996 = vld [vmem:[%s2 + $0xc] sm:$0xf]
      %v997 = vld [vmem:[%s2 + $0x10] sm:$0xf]
      %v998 = vld [vmem:[%s2 + $0x14] sm:$0xf]
      %v999 = vld [vmem:[%s2 + $0x18] sm:$0xf]
      %v1000 = vld [vmem:[%s2 + $0x1c] sm:$0xf]
      %v1001 = vld [vmem:[%s2 + $0x20] sm:$0xf]
      %v1002 = vld [vmem:[%s2 + $0x24] sm:$0xf]
      %v1003 = vld [vmem:[%s2 + $0x28] sm:$0xf]
      %v1004 = vld [vmem:[%s2 + $0x2c] sm:$0xf]
      %v1005 = vld [vmem:[%s2 + $0x30] sm:$0xf]
      %v1006 = vld [vmem:[%s2 + $0x34] sm:$0xf]
      %v1007 = vld [vmem:[%s2 + $0x38] sm:$0xf]
      %v1008 = vld [vmem:[%s2 + $0x3c] sm:$0xf]
      %v1009 = vld [vmem:[%s2 + $0x40] sm:$0xf]
      %v1010 = vld [vmem:[%s2 + $0x44] sm:$0xf]
      %v1011 = vld [vmem:[%s2 + $0x48] sm:$0xf]
      %v1012 = vld [vmem:[%s2 + $0x4c] sm:$0xf]
      %v1013 = vld [vmem:[%s2 + $0x50] sm:$0xf]
      %v1014 = vld [vmem:[%s2 + $0x54] sm:$0xf]
      %v1015 = vld [vmem:[%s2 + $0x58] sm:$0xf]
      %v1016 = vld [vmem:[%s2 + $0x5c] sm:$0xf]
      %v1017 = vld [vmem:[%s2 + $0x60] sm:$0xf]
      %v1018 = vld [vmem:[%s2 + $0x64] sm:$0xf]
      %v1019 = vld [vmem:[%s2 + $0x68] sm:$0xf]
      %v1020 = vld [vmem:[%s2 + $0x6c] sm:$0xf]
      %v1021 = vld [vmem:[%s2 + $0x70] sm:$0xf]
      %v1022 = vld [vmem:[%s2 + $0x74] sm:$0xf]
      %v1023 = vld [vmem:[%s2 + $0x78] sm:$0xf]
      %v1024 = vld [vmem:[%s2 + $0x7c] sm:$0xf]
      %v1057 = vunpack.c.l.b16 %v993
      %v1058 = vunpack.c.l.b16 %v994
      %v1059 = vunpack.c.l.b16 %v995
      %v1060 = vunpack.c.l.b16 %v996
      %v1061 = vunpack.c.l.b16 %v997
      %v1062 = vunpack.c.l.b16 %v998
      %v1063 = vunpack.c.l.b16 %v999
      %v1064 = vunpack.c.l.b16 %v1000
      %v1065 = vunpack.c.l.b16 %v1001
      %v1066 = vunpack.c.l.b16 %v1002
      %v1067 = vunpack.c.l.b16 %v1003
      %v1068 = vunpack.c.l.b16 %v1004
      %v1069 = vunpack.c.l.b16 %v1005
      %v1070 = vunpack.c.l.b16 %v1006
      %v1071 = vunpack.c.l.b16 %v1007
      %v1072 = vunpack.c.l.b16 %v1008
      %v1073 = vunpack.c.l.b16 %v1009
      %v1074 = vunpack.c.l.b16 %v1010
      %v1075 = vunpack.c.l.b16 %v1011
      %v1076 = vunpack.c.l.b16 %v1012
      %v1077 = vunpack.c.l.b16 %v1013
      %v1078 = vunpack.c.l.b16 %v1014
      %v1079 = vunpack.c.l.b16 %v1015
      %v1080 = vunpack.c.l.b16 %v1016
      %v1081 = vunpack.c.l.b16 %v1017
      %v1082 = vunpack.c.l.b16 %v1018
      %v1083 = vunpack.c.l.b16 %v1019
      %v1084 = vunpack.c.l.b16 %v1020
      %v1085 = vunpack.c.l.b16 %v1021
      %v1086 = vunpack.c.l.b16 %v1022
      %v1087 = vunpack.c.l.b16 %v1023
      %v1088 = vunpack.c.l.b16 %v1024
      %v1089 = vpack.c.b16 %v1058, %v1057
      %v1090 = vpack.c.b16 %v1060, %v1059
      %v1091 = vpack.c.b16 %v1062, %v1061
      %v1092 = vpack.c.b16 %v1064, %v1063
      %v1093 = vpack.c.b16 %v1066, %v1065
      %v1094 = vpack.c.b16 %v1068, %v1067
      %v1095 = vpack.c.b16 %v1070, %v1069
      %v1096 = vpack.c.b16 %v1072, %v1071
      %v1097 = vpack.c.b16 %v1074, %v1073
      %v1098 = vpack.c.b16 %v1076, %v1075
      %v1099 = vpack.c.b16 %v1078, %v1077
      %v1100 = vpack.c.b16 %v1080, %v1079
      %v1101 = vpack.c.b16 %v1082, %v1081
      %v1102 = vpack.c.b16 %v1084, %v1083
      %v1103 = vpack.c.b16 %v1086, %v1085
      %v1104 = vpack.c.b16 %v1088, %v1087
      %1121 = vmatpush.bf16.msra.mxu0 %v1096
      %1122 = vmatpush.bf16.msra.mxu0 %v1095
      %1123 = vmatpush.bf16.msra.mxu0 %v1094
      %1124 = vmatpush.bf16.msra.mxu0 %v1093
      %1125 = vmatpush.bf16.msra.mxu0 %v1092
      %1126 = vmatpush.bf16.msra.mxu0 %v1091
      %1127 = vmatpush.bf16.msra.mxu0 %v1090
      %1128 = vmatpush.bf16.msra.mxu0 %v1089
      %1129 = vmatmul.bf16.gmra.mxu0 %v991
      %v1130 = vpop.f32.mrf.mxu0
      %v1131 = vadd.f32 0.0, %v1130
      %v1132 = vpop.f32.mrf.mxu0
      %v1133 = vadd.f32 0.0, %v1132
      %1134 = vdwg.mxu0
      %1135 = vmatpush.bf16.msra.mxu0 %v1104
      %1136 = vmatpush.bf16.msra.mxu0 %v1103
      %1137 = vmatpush.bf16.msra.mxu0 %v1102
      %1138 = vmatpush.bf16.msra.mxu0 %v1101
      %1139 = vmatpush.bf16.msra.mxu0 %v1100
      %1140 = vmatpush.bf16.msra.mxu0 %v1099
      %1141 = vmatpush.bf16.msra.mxu0 %v1098
      %1142 = vmatpush.bf16.msra.mxu0 %v1097
      %1143 = vmatmul.bf16.gmra.mxu0 %v992
      %v1144 = vpop.f32.mrf.mxu0
      %v1145 = vadd.f32 %v1131, %v1144
      %v1146 = vpop.f32.mrf.mxu0
      %v1147 = vadd.f32 %v1133, %v1146
      %1148 = vdwg.mxu0
      %vm1149 = vcmask 80896
      %1150 = vst.msk [vmem:[%s175] sm:$0xff] %vm1149, %v1145
      %1151 = vst.msk [vmem:[%s175 + $0x8] sm:$0xff] %vm1149, %v1147
      %s1152 = smul.u32 2, %s14
      %p1153 = scmp.lt.s32.totalorder %s1152, 3
      %s1154 = scalar_select %p1153, %s1152, 3
      %s1155 = smul.addr %s1154, 8
      %s1156 = scalar_lea.vmem %s3, %s1155
      // Predicated region
      $region33: #{net_sparse_forward.1} parent=31 // pred_check
        %p1157 = pneg %p100
      $region34: #{net_sparse_forward.1} parent=31 // pred_check_branch
        %1159 = sbr.rel (%p1157) target = $region36
      $region35: #{net_sparse_forward.1} parent=31 // pred_region
        %s1160 = smul.u32 2, %s14
      $region36: #{net_sparse_forward.1} parent=31 // pred_fallthru
        _
    $region32: #{net_sparse_forward.1} parent=5 // pred_fallthru
      _
    %p1161 = scmp.le.s32.totalorder 2, %s9
    // Predicated region
    $region37: #{net_sparse_forward.1} parent=5 // pred_check
      %p1162 = pneg %p1161
    $region38: #{net_sparse_forward.1} parent=5 // pred_check_branch
      %1164 = sbr.rel (%p1162) target = $region40
    $region39: #{net_sparse_forward.1} parent=5 // pred_region
      %s1165 = ssub.s32 %s9, 2
      // Predicated region
      $region41: #{net_sparse_forward.1} parent=39 // pred_check
        %p1166 = pneg %p106
      $region42: #{net_sparse_forward.1} parent=39 // pred_check_branch
        %1168 = sbr.rel (%p1166) target = $region44
      $region43: #{net_sparse_forward.1} parent=39 // pred_region
        %s1169 = smul.u32 2, %s15
        %p1170 = scmp.lt.s32.totalorder %s1169, 3
        %s1171 = scalar_select %p1170, %s1169, 3
        %s1172 = smul.addr %s1171, 8
        %s1173 = scalar_lea.vmem %s3, %s1172
      $region44: #{net_sparse_forward.1} parent=39 // pred_fallthru
        _
    $region40: #{net_sparse_forward.1} parent=5 // pred_fallthru
      _
  $region6: #{net_sparse_forward.1} parent=0 // loop_footer
    %s13 = sadd.s32 1, %s9
  $region7: #{net_sparse_forward.1} parent=0 // loop_footer_branch
    %8 = sbr.rel target = $region3
  $region8: #{net_sparse_forward.1} parent=0 // loop_exit
    _

</llo_original>
